<compile_context>
chip_gen: v7x
topology: tpu7x:2x2x1
jax: 0.10.0
libtpu: 0.0.40
codegen_flags: <defaults>
</compile_context>

<pallas_src>
import functools

import jax
import jax.numpy as jnp
from jax.experimental import pallas as pl
from jax.experimental.pallas import tpu as pltpu


def _round_up(x: int, m: int) -> int:
    return ((x + m - 1) // m) * m


# Conservative per-buffer-set budget (base+source+out rows); x2 double-buffered
# this fits every generation's scoped-VMEM default with headroom for weights.
_VMEM_TILE_BUDGET = 12 * 1024 * 1024


def _choose_tile(batch: int, bytes_per_row: int, batch_tile: int) -> int:
    tile = _round_up(max(8, min(int(batch_tile), batch)), 8)
    # Keep >= 4 grid steps on large batches: v7x's 2nd TensorCore gets work and
    # BlockSpec double-buffering keeps pipelining.
    if batch >= 4 * 8:
        tile = min(tile, _round_up(-(-batch // 4), 8))
    # VMEM cap: double-buffered base+source+out tiles must fit the budget.
    max_rows = max(8, (_VMEM_TILE_BUDGET // max(bytes_per_row, 1)) // 8 * 8)
    return max(8, min(tile, max_rows))


def _folded_kernel(base_ref, source_ref, m1_ref, m2_ref, out_ref):
    """Small-dim path: out = base @ (I + Wb Wb^T) - source @ (Ws Wb^T)."""
    acc = jnp.dot(base_ref[...], m1_ref[...], preferred_element_type=jnp.float32)
    acc = acc - jnp.dot(source_ref[...], m2_ref[...], preferred_element_type=jnp.float32)
    out_ref[...] = acc.astype(out_ref.dtype)


def _lowrank_kernel(base_ref, source_ref, wb_ref, ws_ref, wbt_ref, out_ref):
    """Large-dim path: out = base + (base @ Wb - source @ Ws) @ Wb^T."""
    rb = jnp.dot(base_ref[...], wb_ref[...], preferred_element_type=jnp.float32)
    rs = jnp.dot(source_ref[...], ws_ref[...], preferred_element_type=jnp.float32)
    diff = (rb - rs).astype(wbt_ref.dtype)
    out = jnp.dot(diff, wbt_ref[...], preferred_element_type=jnp.float32)
    out = out + base_ref[...].astype(jnp.float32)
    out_ref[...] = out.astype(out_ref.dtype)


def intervention_forward(base, source, w_base, w_source, *,
                         batch_tile: int = 8192, max_fold_dim: int = 128):
    """Pallas forward.

    base:     [B, Db]
    source:   [B, Ds]
    w_base:   [Db, R]  (orthonormal columns)
    w_source: [Ds, R]  (orthonormal columns)
    returns:  [B, Db]
    """
    B, Db = base.shape
    _, Ds = source.shape
    Dbw, R = w_base.shape
    assert Dbw == Db and w_source.shape == (Ds, R)

    dtype = base.dtype
    itemsize = jnp.dtype(dtype).itemsize
    bytes_per_row = (2 * Db + Ds) * itemsize

    tile = _choose_tile(B, bytes_per_row, batch_tile)
    grid = (pl.cdiv(B, tile),)

    use_fold = (Db <= max_fold_dim) and (Ds <= max_fold_dim)

    if use_fold:
        weight_bytes = (Db * Db + Ds * Db) * itemsize
    else:
        weight_bytes = (2 * Db * R + Ds * R) * itemsize

    # Explicit scoped-VMEM limit only when the working set might exceed the
    # smallest generation default (v5e: 16 MiB); capped well below v7x's 64 MiB.
    need_bytes = 2 * tile * bytes_per_row + 2 * weight_bytes + (2 << 20)
    compiler_kwargs = dict(dimension_semantics=("parallel",))
    if need_bytes > (14 << 20):
        compiler_kwargs["vmem_limit_bytes"] = int(min(need_bytes + (4 << 20), 48 << 20))
    compiler_params = pltpu.CompilerParams(**compiler_kwargs)

    # TODO(synk): dropout with ratio > 0.0 in training mode is not applied
    # (module default dropout_ratio=0.0 / eval mode -> identity).
    # TODO(synk): if the caller can donate `base`, input_output_aliases={0: 0}
    # would reuse its HBM buffer for the output (same shape/dtype).

    if use_fold:
        wb32 = w_base.astype(jnp.float32)
        ws32 = w_source.astype(jnp.float32)
        m1 = (jnp.eye(Db, dtype=jnp.float32) + wb32 @ wb32.T).astype(dtype)  # [Db, Db]
        m2 = (ws32 @ wb32.T).astype(dtype)                                   # [Ds, Db]

        cost = pl.CostEstimate(
            flops=2 * B * Db * (Db + Ds),
            transcendentals=0,
            bytes_accessed=(B * (2 * Db + Ds) + Db * Db + Ds * Db) * itemsize,
        )
        return pl.pallas_call(
            _folded_kernel,
            out_shape=jax.ShapeDtypeStruct((B, Db), dtype),
            grid_spec=pltpu.PrefetchScalarGridSpec(
                num_scalar_prefetch=0,
                grid=grid,
                in_specs=[
                    pl.BlockSpec((tile, Db), lambda i: (i, 0)),  # base tile (pipelined)
                    pl.BlockSpec((tile, Ds), lambda i: (i, 0)),  # source tile (pipelined)
                    pl.BlockSpec((Db, Db), lambda i: (0, 0)),    # M1 (resident)
                    pl.BlockSpec((Ds, Db), lambda i: (0, 0)),    # M2 (resident)
                ],
                out_specs=pl.BlockSpec((tile, Db), lambda i: (i, 0)),
            ),
            compiler_params=compiler_params,
            cost_estimate=cost,
        )(base, source, m1, m2)

    # Low-rank path: keep only the small factors resident; Wb^T precomputed once
    # (plain XLA) so the kernel never transposes per tile.
    wb = w_base.astype(dtype)
    ws = w_source.astype(dtype)
    wbt = jnp.transpose(wb)  # [R, Db]

    cost = pl.CostEstimate(
        flops=2 * B * R * (2 * Db + Ds),
        transcendentals=0,
        bytes_accessed=(B * (2 * Db + Ds) + 2 * Db * R + Ds * R) * itemsize,
    )
    return pl.pallas_call(
        _lowrank_kernel,
        out_shape=jax.ShapeDtypeStruct((B, Db), dtype),
        grid_spec=pltpu.PrefetchScalarGridSpec(
            num_scalar_prefetch=0,
            grid=grid,
            in_specs=[
                pl.BlockSpec((tile, Db), lambda i: (i, 0)),  # base tile
                pl.BlockSpec((tile, Ds), lambda i: (i, 0)),  # source tile
                pl.BlockSpec((Db, R), lambda i: (0, 0)),     # Wb   (resident)
                pl.BlockSpec((Ds, R), lambda i: (0, 0)),     # Ws   (resident)
                pl.BlockSpec((R, Db), lambda i: (0, 0)),     # Wb^T (resident)
            ],
            out_specs=pl.BlockSpec((tile, Db), lambda i: (i, 0)),
        ),
        compiler_params=compiler_params,
        cost_estimate=cost,
    )(base, source, wb, ws, wbt)


def _orthogonal_init(key, rows, cols, dtype=jnp.float32):
    """Deterministic orthogonal init (orthonormal columns), like nn.init.orthogonal_."""
    a = jax.random.normal(key, (rows, cols), dtype=jnp.float32)
    q, r = jnp.linalg.qr(a)
    d = jnp.diagonal(r)
    q = q * jnp.where(d >= 0, 1.0, -1.0)[None, :]
    return q.astype(dtype)


def _reference_forward(base, source, w_base, w_source):
    rotated_base = base @ w_base
    rotated_source = source @ w_source
    return (rotated_base - rotated_source) @ w_base.T + base


if __name__ == "__main__":
    # Small shapes consistent with the module: base_dim > low_rank_dim.
    base_dim = 32
    source_dim = 16
    low_rank_dim = 8

    key = jax.random.PRNGKey(0)
    k_base, k_src, k_wb, k_ws = jax.random.split(key, 4)

    w_base = _orthogonal_init(k_wb, base_dim, low_rank_dim)
    w_source = _orthogonal_init(k_ws, source_dim, low_rank_dim)

    # Case 1: tiny batch, default tile (single step, folded path).
    batch = 8
    base = jax.random.normal(k_base, (batch, base_dim), dtype=jnp.float32)
    source = jax.random.normal(k_src, (batch, source_dim), dtype=jnp.float32)
    fwd = jax.jit(functools.partial(intervention_forward))
    out = jax.block_until_ready(fwd(base, source, w_base, w_source))
    ref = _reference_forward(base, source, w_base, w_source)
    assert out.shape == (batch, base_dim)
    assert jnp.allclose(out, ref, atol=1e-4, rtol=1e-4)

    # Case 2: ragged batch (B % tile != 0) -> multi-step grid with a masked
    # partial last block, no padding copies (folded path).
    batch2 = 20
    base2 = jax.random.normal(jax.random.PRNGKey(1), (batch2, base_dim), dtype=jnp.float32)
    source2 = jax.random.normal(jax.random.PRNGKey(2), (batch2, source_dim), dtype=jnp.float32)
    fwd2 = jax.jit(functools.partial(intervention_forward, batch_tile=8))
    out2 = jax.block_until_ready(fwd2(base2, source2, w_base, w_source))
    ref2 = _reference_forward(base2, source2, w_base, w_source)
    assert out2.shape == (batch2, base_dim)
    assert jnp.allclose(out2, ref2, atol=1e-4, rtol=1e-4)

    # Case 3: force the low-rank (un-folded) kernel path at small shapes.
    batch3 = 24
    base3 = jax.random.normal(jax.random.PRNGKey(3), (batch3, base_dim), dtype=jnp.float32)
    source3 = jax.random.normal(jax.random.PRNGKey(4), (batch3, source_dim), dtype=jnp.float32)
    fwd3 = jax.jit(functools.partial(intervention_forward, batch_tile=8, max_fold_dim=8))
    out3 = jax.block_until_ready(fwd3(base3, source3, w_base, w_source))
    ref3 = _reference_forward(base3, source3, w_base, w_source)
    assert out3.shape == (batch3, base_dim)
    assert jnp.allclose(out3, ref3, atol=1e-4, rtol=1e-4)

    print("KERNEL_OK")
</pallas_src>

<mosaic_0001>
module attributes {stable_mosaic.version = 11 : i64} {
  func.func @_folded_kernel(%arg0: i32, %arg1: memref<8x32xf32, #tpu.memory_space<vmem>>, %arg2: memref<8x16xf32, #tpu.memory_space<vmem>>, %arg3: memref<32x32xf32, #tpu.memory_space<vmem>>, %arg4: memref<16x32xf32, #tpu.memory_space<vmem>>, %arg5: memref<8x32xf32, #tpu.memory_space<vmem>>) attributes {dimension_semantics = [#tpu.dimension_semantics<parallel>], iteration_bounds = array<i64: 1>, scalar_prefetch = 0 : i64, scratch_operands = 0 : i64, tpu.core_type = #tpu.core_type<tc>, window_params = [{transform_indices = @transform_0, window_bounds = array<i64: 8, 32>}, {transform_indices = @transform_1, window_bounds = array<i64: 8, 16>}, {pipeline_mode = #tpu.pipeline_mode<synchronous>, transform_indices = @transform_2, window_bounds = array<i64: 32, 32>}, {pipeline_mode = #tpu.pipeline_mode<synchronous>, transform_indices = @transform_3, window_bounds = array<i64: 16, 32>}, {transform_indices = @transform_4, window_bounds = array<i64: 8, 32>}]} {
    %c0 = arith.constant 0 : index
    %c0_0 = arith.constant 0 : index
    %0 = vector.load %arg1[%c0, %c0_0] : memref<8x32xf32, #tpu.memory_space<vmem>>, vector<8x32xf32>
    %c0_1 = arith.constant 0 : index
    %c0_2 = arith.constant 0 : index
    %1 = vector.load %arg3[%c0_1, %c0_2] : memref<32x32xf32, #tpu.memory_space<vmem>>, vector<32x32xf32>
    %cst = arith.constant dense<0.000000e+00> : vector<8x32xf32>
    %2 = tpu.matmul %0, %1, %cst {dimension_numbers = #tpu.dot_dimension_numbers<[1], [0], [0], [1], [0, 0, 1, 1], [], []>} : vector<8x32xf32>, vector<32x32xf32>, vector<8x32xf32> -> vector<8x32xf32>
    %c0_3 = arith.constant 0 : index
    %c0_4 = arith.constant 0 : index
    %3 = vector.load %arg2[%c0_3, %c0_4] : memref<8x16xf32, #tpu.memory_space<vmem>>, vector<8x16xf32>
    %c0_5 = arith.constant 0 : index
    %c0_6 = arith.constant 0 : index
    %4 = vector.load %arg4[%c0_5, %c0_6] : memref<16x32xf32, #tpu.memory_space<vmem>>, vector<16x32xf32>
    %cst_7 = arith.constant dense<0.000000e+00> : vector<8x32xf32>
    %5 = tpu.matmul %3, %4, %cst_7 {dimension_numbers = #tpu.dot_dimension_numbers<[1], [0], [0], [1], [0, 0, 1, 1], [], []>} : vector<8x16xf32>, vector<16x32xf32>, vector<8x32xf32> -> vector<8x32xf32>
    %6 = arith.subf %2, %5 : vector<8x32xf32>
    %c0_8 = arith.constant 0 : index
    %c0_9 = arith.constant 0 : index
    %7 = vector.load %arg5[%c0_8, %c0_9] : memref<8x32xf32, #tpu.memory_space<vmem>>, vector<8x32xf32>
    tpu.vector_store %arg5[%c0_8, %c0_9], %6 {strides = array<i32>} : memref<8x32xf32, #tpu.memory_space<vmem>>, vector<8x32xf32>,
    return
  }
  func.func @transform_0(%arg0: i32) -> (i32, i32) {
    %c0_i32 = arith.constant 0 : i32
    %c0_i32_0 = arith.constant 0 : i32
    return %arg0, %c0_i32 : i32, i32
  }
  func.func @transform_1(%arg0: i32) -> (i32, i32) {
    %c0_i32 = arith.constant 0 : i32
    %c0_i32_0 = arith.constant 0 : i32
    return %arg0, %c0_i32 : i32, i32
  }
  func.func @transform_2(%arg0: i32) -> (i32, i32) {
    %c0_i32 = arith.constant 0 : i32
    %c0_i32_0 = arith.constant 0 : i32
    %c0_i32_1 = arith.constant 0 : i32
    return %c0_i32, %c0_i32_0 : i32, i32
  }
  func.func @transform_3(%arg0: i32) -> (i32, i32) {
    %c0_i32 = arith.constant 0 : i32
    %c0_i32_0 = arith.constant 0 : i32
    %c0_i32_1 = arith.constant 0 : i32
    return %c0_i32, %c0_i32_0 : i32, i32
  }
  func.func @transform_4(%arg0: i32) -> (i32, i32) {
    %c0_i32 = arith.constant 0 : i32
    %c0_i32_0 = arith.constant 0 : i32
    return %arg0, %c0_i32 : i32, i32
  }
}

</mosaic_0001>

<llo_original>
// kernel: intervention_forward.1
$region0: #{intervention_forward.1}
  #allocation0 [shape = 'u32[]', space=smem, size = 0x4, offset = 0x4, fixed_abs, tag = 'smem constant byte address 0x4 - core index']
  #allocation1 [shape = 'u32[144,128]{1,0:T(1,128)}', space=vmem, size = 0x12000, scoped, tag = 'internal scratch']
  %s0 = inlined_call_operand.vmem [shape: f32[8,32], index: 0, kind: input, shape index: {}]
  %s1 = inlined_call_operand.vmem [shape: f32[8,16], index: 1, kind: input, shape index: {}]
  %s2 = inlined_call_operand.vmem [shape: f32[32,32], index: 2, kind: input, shape index: {}]
  %s3 = inlined_call_operand.vmem [shape: f32[16,32], index: 3, kind: input, shape index: {}]
  %s4 = inlined_call_operand.hbm [shape: f32[8,32], index: 4, kind: output, shape index: {}]
  %s5 = sld [smem:[#allocation0]]
  $region26: #{intervention_forward.1} parent=0
    _
  %s7 = ssub.s32 1, %s5
  %s8 = scalar_select 0, %s7, %s5
  $region1: #{intervention_forward.1} parent=0
    #allocation2 [shape = 'u8[4096]{0}', space=vmem, size = 0x1000, scoped, tag = 'output window, operand 0, single buffered']
    #allocation3 [shape = 's32[1]{0}', space=sflag, size = 0x4, scoped, tag = 'scoped memory for intervention_forward.1']
    %9 = vsyncpa [#allocation3], 0
    // Predicated region
    $region2: #{intervention_forward.1} parent=1 // pred_check
      _
    $region3: #{intervention_forward.1} parent=1 // pred_check_branch
      %11 = sbr.rel (0) target = $region5
    $region4: #{intervention_forward.1} parent=1 // pred_region
      _
    $region5: #{intervention_forward.1} parent=1 // pred_fallthru
      _
    // Predicated region
    $region6: #{intervention_forward.1} parent=1 // pred_check
      _
    $region7: #{intervention_forward.1} parent=1 // pred_check_branch
      %13 = sbr.rel (0) target = $region9
    $region8: #{intervention_forward.1} parent=1 // pred_region
      _
    $region9: #{intervention_forward.1} parent=1 // pred_fallthru
      _
    // Predicated region
    $region10: #{intervention_forward.1} parent=1 // pred_check
      _
    $region11: #{intervention_forward.1} parent=1 // pred_check_branch
      %15 = sbr.rel (0) target = $region13
    $region12: #{intervention_forward.1} parent=1 // pred_region
      _
    $region13: #{intervention_forward.1} parent=1 // pred_fallthru
      _
    // Predicated region
    $region14: #{intervention_forward.1} parent=1 // pred_check
      _
    $region15: #{intervention_forward.1} parent=1 // pred_check_branch
      %17 = sbr.rel (0) target = $region17
    $region16: #{intervention_forward.1} parent=1 // pred_region
      _
    $region17: #{intervention_forward.1} parent=1 // pred_fallthru
      _
    %v18 = vld [vmem:[%s0] sm:$0xff]
    %v19 = vld [vmem:[%s2] sm:$0xff]
    %v20 = vld [vmem:[%s2 + $0x8] sm:$0xff]
    %v21 = vld [vmem:[%s2 + $0x10] sm:$0xff]
    %v22 = vld [vmem:[%s2 + $0x18] sm:$0xff]
    %vm23 = vcmask 261120
    %v25 = vsel %vm23, %v18, 0
    %27 = vmatprep.subr.mxu0 0.0
    %28 = vmatpush1.msra.mxu0 %v19
    %29 = vmatprep.subr.mxu0 0.0
    %30 = vmatpush1.msra.mxu0 %v20
    %31 = vmatprep.subr.mxu0 0.0
    %32 = vmatpush1.msra.mxu0 %v21
    %33 = vmatprep.subr.mxu0 0.0
    %34 = vmatpush1.msra.mxu0 %v22
    %35 = vmatprep.subr.mxu0 0.0
    %36 = vmatpush1.msra.mxu0 0.0
    %37 = vmatprep.subr.mxu0 0.0
    %38 = vmatpush1.msra.mxu0 0.0
    %39 = vmatprep.subr.mxu0 0.0
    %40 = vmatpush1.msra.mxu0 0.0
    %41 = vmatprep.subr.mxu0 0.0
    %42 = vmatpush1.msra.mxu0 0.0
    %43 = vmatprep.subr.mxu0 0.0
    %44 = vmatpush1.msra.mxu0 0.0
    %45 = vmatprep.subr.mxu0 0.0
    %46 = vmatpush1.msra.mxu0 0.0
    %47 = vmatprep.subr.mxu0 0.0
    %48 = vmatpush1.msra.mxu0 0.0
    %49 = vmatprep.subr.mxu0 0.0
    %50 = vmatpush1.msra.mxu0 0.0
    %51 = vmatprep.subr.mxu0 0.0
    %52 = vmatpush1.msra.mxu0 0.0
    %53 = vmatprep.subr.mxu0 0.0
    %54 = vmatpush1.msra.mxu0 0.0
    %55 = vmatprep.subr.mxu0 0.0
    %56 = vmatpush1.msra.mxu0 0.0
    %57 = vmatprep.subr.mxu0 0.0
    %58 = vmatpush1.msra.mxu0 0.0
    %59 = vmatprep.subr.mxu0 0.0
    %60 = vmatpush1.msra.mxu0 0.0
    %61 = vmatprep.subr.mxu0 0.0
    %62 = vmatpush1.msra.mxu0 0.0
    %63 = vmatprep.subr.mxu0 0.0
    %64 = vmatpush1.msra.mxu0 0.0
    %65 = vmatprep.subr.mxu0 0.0
    %66 = vmatpush1.msra.mxu0 0.0
    %67 = vmatprep.subr.mxu0 0.0
    %68 = vmatpush1.msra.mxu0 0.0
    %69 = vmatprep.subr.mxu0 0.0
    %70 = vmatpush1.msra.mxu0 0.0
    %71 = vmatprep.subr.mxu0 0.0
    %72 = vmatpush1.msra.mxu0 0.0
    %73 = vmatprep.subr.mxu0 0.0
    %74 = vmatpush1.msra.mxu0 0.0
    %75 = vmatprep.subr.mxu0 0.0
    %76 = vmatpush1.msra.mxu0 0.0
    %77 = vmatprep.subr.mxu0 0.0
    %78 = vmatpush1.msra.mxu0 0.0
    %79 = vmatprep.subr.mxu0 0.0
    %80 = vmatpush1.msra.mxu0 0.0
    %81 = vmatprep.subr.mxu0 0.0
    %82 = vmatpush1.msra.mxu0 0.0
    %83 = vmatprep.subr.mxu0 0.0
    %84 = vmatpush1.msra.mxu0 0.0
    %85 = vmatprep.subr.mxu0 0.0
    %86 = vmatpush1.msra.mxu0 0.0
    %87 = vmatprep.subr.mxu0 0.0
    %88 = vmatpush1.msra.mxu0 0.0
    %89 = vmatprep.subr.mxu0 0.0
    %90 = vmatpush1.msra.mxu0 0.0
    %91 = vmatprep.mubr.f32.mxu0 0.0
    %92 = vmatmul.mubr.f32.gmra.mrb[0].mxu0 %v25
    %v93 = vpop.f32.mrb[0].mxu0
    %v94 = vadd.f32 0.0, %v93
    %v95 = vpop.f32.mrb[0].mxu0
    %96 = vdwg.mxu0
    %v97 = vld [vmem:[%s1] sm:$0xff]
    %v98 = vld [vmem:[%s3] sm:$0xff]
    %v99 = vld [vmem:[%s3 + $0x8] sm:$0xff]
    %vm100 = vcmask 130048
    %v102 = vsel %vm100, %v97, 0
    %104 = vmatprep.subr.mxu0 0.0
    %105 = vmatpush1.msra.mxu0 %v98
    %106 = vmatprep.subr.mxu0 0.0
    %107 = vmatpush1.msra.mxu0 %v99
    %108 = vmatprep.subr.mxu0 0.0
    %109 = vmatpush1.msra.mxu0 0.0
    %110 = vmatprep.subr.mxu0 0.0
    %111 = vmatpush1.msra.mxu0 0.0
    %112 = vmatprep.subr.mxu0 0.0
    %113 = vmatpush1.msra.mxu0 0.0
    %114 = vmatprep.subr.mxu0 0.0
    %115 = vmatpush1.msra.mxu0 0.0
    %116 = vmatprep.subr.mxu0 0.0
    %117 = vmatpush1.msra.mxu0 0.0
    %118 = vmatprep.subr.mxu0 0.0
    %119 = vmatpush1.msra.mxu0 0.0
    %120 = vmatprep.subr.mxu0 0.0
    %121 = vmatpush1.msra.mxu0 0.0
    %122 = vmatprep.subr.mxu0 0.0
    %123 = vmatpush1.msra.mxu0 0.0
    %124 = vmatprep.subr.mxu0 0.0
    %125 = vmatpush1.msra.mxu0 0.0
    %126 = vmatprep.subr.mxu0 0.0
    %127 = vmatpush1.msra.mxu0 0.0
    %128 = vmatprep.subr.mxu0 0.0
    %129 = vmatpush1.msra.mxu0 0.0
    %130 = vmatprep.subr.mxu0 0.0
    %131 = vmatpush1.msra.mxu0 0.0
    %132 = vmatprep.subr.mxu0 0.0
    %133 = vmatpush1.msra.mxu0 0.0
    %134 = vmatprep.subr.mxu0 0.0
    %135 = vmatpush1.msra.mxu0 0.0
    %136 = vmatprep.subr.mxu0 0.0
    %137 = vmatpush1.msra.mxu0 0.0
    %138 = vmatprep.subr.mxu0 0.0
    %139 = vmatpush1.msra.mxu0 0.0
    %140 = vmatprep.subr.mxu0 0.0
    %141 = vmatpush1.msra.mxu0 0.0
    %142 = vmatprep.subr.mxu0 0.0
    %143 = vmatpush1.msra.mxu0 0.0
    %144 = vmatprep.subr.mxu0 0.0
    %145 = vmatpush1.msra.mxu0 0.0
    %146 = vmatprep.subr.mxu0 0.0
    %147 = vmatpush1.msra.mxu0 0.0
    %148 = vmatprep.subr.mxu0 0.0
    %149 = vmatpush1.msra.mxu0 0.0
    %150 = vmatprep.subr.mxu0 0.0
    %151 = vmatpush1.msra.mxu0 0.0
    %152 = vmatprep.subr.mxu0 0.0
    %153 = vmatpush1.msra.mxu0 0.0
    %154 = vmatprep.subr.mxu0 0.0
    %155 = vmatpush1.msra.mxu0 0.0
    %156 = vmatprep.subr.mxu0 0.0
    %157 = vmatpush1.msra.mxu0 0.0
    %158 = vmatprep.subr.mxu0 0.0
    %159 = vmatpush1.msra.mxu0 0.0
    %160 = vmatprep.subr.mxu0 0.0
    %161 = vmatpush1.msra.mxu0 0.0
    %162 = vmatprep.subr.mxu0 0.0
    %163 = vmatpush1.msra.mxu0 0.0
    %164 = vmatprep.subr.mxu0 0.0
    %165 = vmatpush1.msra.mxu0 0.0
    %166 = vmatprep.subr.mxu0 0.0
    %167 = vmatpush1.msra.mxu0 0.0
    %168 = vmatprep.mubr.f32.mxu0 0.0
    %169 = vmatmul.mubr.f32.gmra.mrb[0].mxu0 %v102
    %v170 = vpop.f32.mrb[0].mxu0
    %v171 = vadd.f32 0.0, %v170
    %v172 = vpop.f32.mrb[0].mxu0
    %173 = vdwg.mxu0
    %v174 = vsub.f32 %v94, %v171
    %175 = vst.msk [vmem:[#allocation2] sm:$0xff] %vm23, %v174
    // Predicated region
    $region18: #{intervention_forward.1} parent=1 // pred_check
      _
    $region19: #{intervention_forward.1} parent=1 // pred_check_branch
      %177 = sbr.rel (0) target = $region21
    $region20: #{intervention_forward.1} parent=1 // pred_region
      %s179 = ssub.s32 128, 128
      %180 = vsyncadd [#allocation3], %s179
      %s182 = sshll.u32 [#allocation2], 4
      %s183 = int_to_ptr.vmem [resolvable:$true] %s182
      %185 = dma.vmem_to_hbm [thread:$0]  %s183, 128, %s4, [#allocation3]
    $region21: #{intervention_forward.1} parent=1 // pred_fallthru
      _
    // Predicated region
    $region22: #{intervention_forward.1} parent=1 // pred_check
      _
    $region23: #{intervention_forward.1} parent=1 // pred_check_branch
      %187 = sbr.rel (0) target = $region25
    $region24: #{intervention_forward.1} parent=1 // pred_region
      %188 = dma.done [#allocation3], 128
    $region25: #{intervention_forward.1} parent=1 // pred_fallthru
      _
    %189 = vsyncpa [#allocation3], 1

</llo_original>
